<compile_context>
chip_gen: v6e
topology: v6e:2x2x1
jax: 0.10.0
libtpu: 0.0.40
codegen_flags: <defaults>
</compile_context>

<pallas_src>
import jax
import jax.numpy as jnp
from jax.experimental import pallas as pl
from jax.experimental.pallas import tpu as pltpu


def _se_kernel(x_ref, w1t_ref, w2_ref, o_ref):
    # x_ref block: (1, C, HW) f32; w1t_ref: (C, Cr); w2_ref: (C, Cr)
    x = x_ref[0]                                           # (C, HW)
    hw = x.shape[1]

    # squeeze: global average pool over the spatial (lane) axis -> (C, 1)
    y = jnp.sum(x, axis=-1, keepdims=True) * (1.0 / hw)

    # excitation, fc1: h[j] = sum_c W1[j, c] * y[c]  (VPU mul + sublane reduce)
    h = jnp.sum(w1t_ref[...] * y, axis=0, keepdims=True)   # (1, Cr)
    h = jnp.maximum(h, 0.0)

    # excitation, fc2: s[c] = sum_j W2[c, j] * h[j]  (VPU mul + lane reduce)
    s = jnp.sum(w2_ref[...] * h, axis=-1, keepdims=True)   # (C, 1)
    s = jax.nn.sigmoid(s)

    # scale: broadcast the per-channel gate over all spatial positions
    o_ref[0] = x * s


def se_layer(x_nchw, w1, w2):
    """x_nchw: (B, C, H, W) f32; w1: (C//r, C); w2: (C, C//r). Returns (B, C, H, W)."""
    B, C, H, W = x_nchw.shape
    Cr = w1.shape[0]
    HW = H * W

    # Pure reshape (free) -- no NCHW<->NHWC transposes, no extra HBM pass.
    x_flat = x_nchw.reshape(B, C, HW)
    w1t = jnp.transpose(w1)      # (C, Cr)  tiny one-time transpose of weights

    out_flat = pl.pallas_call(
        _se_kernel,
        out_shape=jax.ShapeDtypeStruct((B, C, HW), x_nchw.dtype),
        grid_spec=pltpu.PrefetchScalarGridSpec(
            num_scalar_prefetch=0,
            grid=(B,),
            in_specs=[
                pl.BlockSpec((1, C, HW), lambda b: (b, 0, 0)),
                pl.BlockSpec((C, Cr), lambda b: (0, 0)),
                pl.BlockSpec((C, Cr), lambda b: (0, 0)),
            ],
            out_specs=pl.BlockSpec((1, C, HW), lambda b: (b, 0, 0)),
        ),
        compiler_params=pltpu.CompilerParams(
            dimension_semantics=("parallel",)),
    )(x_flat, w1t, w2)

    return out_flat.reshape(B, C, H, W)


def se_layer_ref(x, w1, w2):
    # pure-JAX reference mirroring the PyTorch module
    y = jnp.mean(x, axis=(2, 3))                  # (B, C)
    y = jnp.maximum(y @ w1.T, 0.0)                # (B, Cr)
    y = jax.nn.sigmoid(y @ w2.T)                  # (B, C)
    return x * y[:, :, None, None]


if __name__ == "__main__":
    # SELayer(c1=36, r=18) -> hidden = 36 // 18 = 2
    B, C, H, W = 2, 36, 16, 16
    r = 18
    Cr = C // r

    key = jax.random.PRNGKey(0)
    kx, k1, k2 = jax.random.split(key, 3)
    x = jax.random.normal(kx, (B, C, H, W), dtype=jnp.float32)
    # deterministic synthetic weights (nn.Linear, bias=False)
    w1 = jax.random.normal(k1, (Cr, C), dtype=jnp.float32) * (1.0 / jnp.sqrt(C))
    w2 = jax.random.normal(k2, (C, Cr), dtype=jnp.float32) * (1.0 / jnp.sqrt(Cr))

    out = se_layer(x, w1, w2)
    out = jax.block_until_ready(out)

    ref = se_layer_ref(x, w1, w2)
    assert out.shape == (B, C, H, W)
    assert jnp.allclose(out, ref, atol=1e-5, rtol=1e-5), "mismatch vs reference"

    print("KERNEL_OK")
</pallas_src>

<mosaic_0001>
module attributes {stable_mosaic.version = 11 : i64} {
  func.func @_se_kernel(%arg0: i32, %arg1: memref<1x36x256xf32, #tpu.memory_space<vmem>>, %arg2: memref<36x2xf32, #tpu.memory_space<vmem>>, %arg3: memref<36x2xf32, #tpu.memory_space<vmem>>, %arg4: memref<1x36x256xf32, #tpu.memory_space<vmem>>) attributes {dimension_semantics = [#tpu.dimension_semantics<parallel>], iteration_bounds = array<i64: 2>, scalar_prefetch = 0 : i64, scratch_operands = 0 : i64, tpu.core_type = #tpu.core_type<tc>, window_params = [{transform_indices = @transform_0, window_bounds = array<i64: 1, 36, 256>}, {pipeline_mode = #tpu.pipeline_mode<synchronous>, transform_indices = @transform_1, window_bounds = array<i64: 36, 2>}, {pipeline_mode = #tpu.pipeline_mode<synchronous>, transform_indices = @transform_2, window_bounds = array<i64: 36, 2>}, {transform_indices = @transform_3, window_bounds = array<i64: 1, 36, 256>}]} {
    %c0 = arith.constant 0 : index
    %c0_0 = arith.constant 0 : index
    %c0_1 = arith.constant 0 : index
    %0 = vector.load %arg1[%c0, %c0_0, %c0_1] : memref<1x36x256xf32, #tpu.memory_space<vmem>>, vector<1x36x256xf32>
    %1 = vector.shape_cast %0 : vector<1x36x256xf32> to vector<36x256xf32>
    %cst = arith.constant dense<0.000000e+00> : vector<36xf32>
    %2 = vector.multi_reduction <add>, %1, %cst [1] : vector<36x256xf32> to vector<36xf32>
    %3 = vector.shape_cast %2 : vector<36xf32> to vector<36x1xf32>
    %cst_2 = arith.constant 3.906250e-03 : f32
    %4 = vector.broadcast %cst_2 : f32 to vector<36x1xf32>
    %5 = arith.mulf %3, %4 : vector<36x1xf32>
    %c0_3 = arith.constant 0 : index
    %c0_4 = arith.constant 0 : index
    %6 = vector.load %arg2[%c0_3, %c0_4] : memref<36x2xf32, #tpu.memory_space<vmem>>, vector<36x2xf32>
    %7 = vector.broadcast %5 : vector<36x1xf32> to vector<36x2xf32>
    %8 = arith.mulf %6, %7 : vector<36x2xf32>
    %cst_5 = arith.constant dense<0.000000e+00> : vector<2xf32>
    %9 = vector.multi_reduction <add>, %8, %cst_5 [0] : vector<36x2xf32> to vector<2xf32>
    %10 = vector.shape_cast %9 : vector<2xf32> to vector<1x2xf32>
    %cst_6 = arith.constant 0.000000e+00 : f32
    %11 = vector.broadcast %cst_6 : f32 to vector<1x2xf32>
    %12 = arith.maximumf %10, %11 : vector<1x2xf32>
    %c0_7 = arith.constant 0 : index
    %c0_8 = arith.constant 0 : index
    %13 = vector.load %arg3[%c0_7, %c0_8] : memref<36x2xf32, #tpu.memory_space<vmem>>, vector<36x2xf32>
    %14 = vector.broadcast %12 : vector<1x2xf32> to vector<36x2xf32>
    %15 = arith.mulf %13, %14 : vector<36x2xf32>
    %cst_9 = arith.constant dense<0.000000e+00> : vector<36xf32>
    %16 = vector.multi_reduction <add>, %15, %cst_9 [1] : vector<36x2xf32> to vector<36xf32>
    %17 = vector.shape_cast %16 : vector<36xf32> to vector<36x1xf32>
    %18 = arith.negf %17 : vector<36x1xf32>
    %19 = math.exp %18 : vector<36x1xf32>
    %cst_10 = arith.constant 1.000000e+00 : f32
    %20 = vector.broadcast %cst_10 : f32 to vector<36x1xf32>
    %21 = arith.addf %20, %19 : vector<36x1xf32>
    %22 = arith.divf %20, %21 : vector<36x1xf32>
    %23 = vector.broadcast %22 : vector<36x1xf32> to vector<36x256xf32>
    %24 = arith.mulf %1, %23 : vector<36x256xf32>
    %c0_11 = arith.constant 0 : index
    %c0_12 = arith.constant 0 : index
    %c0_13 = arith.constant 0 : index
    %25 = vector.load %arg4[%c0_11, %c0_12, %c0_13] : memref<1x36x256xf32, #tpu.memory_space<vmem>>, vector<1x36x256xf32>
    %26 = vector.shape_cast %25 : vector<1x36x256xf32> to vector<36x256xf32>
    %27 = vector.shape_cast %24 : vector<36x256xf32> to vector<1x36x256xf32>
    tpu.vector_store %arg4[%c0_11, %c0_12, %c0_13], %27 {strides = array<i32>} : memref<1x36x256xf32, #tpu.memory_space<vmem>>, vector<1x36x256xf32>,
    return
  }
  func.func @transform_0(%arg0: i32) -> (i32, i32, i32) {
    %c0_i32 = arith.constant 0 : i32
    %c0_i32_0 = arith.constant 0 : i32
    %c0_i32_1 = arith.constant 0 : i32
    return %arg0, %c0_i32, %c0_i32_0 : i32, i32, i32
  }
  func.func @transform_1(%arg0: i32) -> (i32, i32) {
    %c0_i32 = arith.constant 0 : i32
    %c0_i32_0 = arith.constant 0 : i32
    %c0_i32_1 = arith.constant 0 : i32
    return %c0_i32, %c0_i32_0 : i32, i32
  }
  func.func @transform_2(%arg0: i32) -> (i32, i32) {
    %c0_i32 = arith.constant 0 : i32
    %c0_i32_0 = arith.constant 0 : i32
    %c0_i32_1 = arith.constant 0 : i32
    return %c0_i32, %c0_i32_0 : i32, i32
  }
  func.func @transform_3(%arg0: i32) -> (i32, i32, i32) {
    %c0_i32 = arith.constant 0 : i32
    %c0_i32_0 = arith.constant 0 : i32
    %c0_i32_1 = arith.constant 0 : i32
    return %arg0, %c0_i32, %c0_i32_0 : i32, i32, i32
  }
}

</mosaic_0001>

<llo_original>
// kernel: tpu_custom_call.1
$region0: #{tpu_custom_call.1}
  #allocation0 [shape = 'u32[]', space=smem, size = 0x4, offset = 0x4, fixed_abs, tag = 'smem constant byte address 0x4 - core index']
  #allocation1 [shape = 'u32[144,128]{1,0:T(1,128)}', space=vmem, size = 0x12000, scoped, tag = 'internal scratch']
  %s0 = inlined_call_operand.vmem [shape: f32[2,36,256], index: 0, kind: input, shape index: {}]
  %s1 = inlined_call_operand.vmem [shape: f32[36,2], index: 1, kind: input, shape index: {}]
  %s2 = inlined_call_operand.vmem [shape: f32[36,2], index: 2, kind: input, shape index: {}]
  %s3 = inlined_call_operand.vmem [shape: f32[2,36,256], index: 3, kind: output, shape index: {}]
  %s4 = sld [smem:[#allocation0]]
  $region45: #{tpu_custom_call.1} parent=0
    _
  %s6 = ssub.s32 1, %s4
  %s7 = scalar_select 0, %s6, %s4
  loop: start=0, step=1, limit=4
  $region2: #{tpu_custom_call.1} parent=0 // loop_pre_header
    _
  $region3: #{tpu_custom_call.1} parent=0 // loop_header
    %s9 = sphi 0, %s13
    %p10 = scmp.ge.s32.totalorder %s9, 4
    %s19 = sphi 0, %s21
    %s22 = sphi 0, %s19
    %s23 = sphi 0, %s22
    %s39 = sphi 0, %s23
    %s43 = sphi 0, %s43
    %s45 = sphi 0, %s43
    %s46 = sphi 0, %s45
    %s60 = sphi 0, %s46
    %s64 = sphi 0, %s64
    %s66 = sphi 0, %s64
    %s67 = sphi 0, %s66
    %s81 = sphi 0, %s67
    %s87 = sphi 0, %s89
    %s90 = sphi 0, %s87
    %s91 = sphi 0, %s90
    %s107 = sphi 0, %s91
  $region4: #{tpu_custom_call.1} parent=0 // loop_header_branch
    %12 = sbr.rel (%p10) target = $region8
  $region5: #{tpu_custom_call.1} parent=0 // loop_body
    %s14 = ssub.s32 %s9, 1
    %s15 = ssub.s32 %s9, 2
    %s16 = sadd.s32 %s9, 1
    %s17 = ssub.s32 %s9, %s16
    %p18 = scmp.eq.s32.totalorder %s17, 0
    %s20 = sadd.s32 %s19, 1
    %s21 = scalar_select %p18, %s19, %s20
    %p24 = pneg %p18
    %p25 = scmp.eq.s32.totalorder %s9, 1
    %p26 = por %p24, %p25
    %p27 = scmp.ne.s32.totalorder %s19, %s22
    %p28 = scmp.eq.s32.totalorder %s9, 0
    %p29 = por %p27, %p28
    %p30 = scmp.ne.s32.totalorder %s19, %s22
    %p31 = scmp.eq.s32.totalorder %s14, 1
    %p32 = por %p30, %p31
    %p33 = scmp.ne.s32.totalorder %s22, %s23
    %p34 = scmp.eq.s32.totalorder %s14, 0
    %p35 = por %p33, %p34
    %p36 = scmp.ne.s32.totalorder %s22, %s23
    %p37 = scmp.eq.s32.totalorder %s15, 1
    %p38 = por %p36, %p37
    %p40 = scmp.ne.s32.totalorder %s23, %s39
    %p41 = scmp.eq.s32.totalorder %s15, 0
    %p42 = por %p40, %p41
    %s44 = sadd.s32 %s43, 1
    %p47 = scmp.eq.s32.totalorder %s9, 1
    %p48 = scmp.ne.s32.totalorder %s43, %s45
    %p49 = scmp.eq.s32.totalorder %s9, 0
    %p50 = por %p48, %p49
    %p51 = scmp.ne.s32.totalorder %s43, %s45
    %p52 = scmp.eq.s32.totalorder %s14, 1
    %p53 = por %p51, %p52
    %p54 = scmp.ne.s32.totalorder %s45, %s46
    %p55 = scmp.eq.s32.totalorder %s14, 0
    %p56 = por %p54, %p55
    %p57 = scmp.ne.s32.totalorder %s45, %s46
    %p58 = scmp.eq.s32.totalorder %s15, 1
    %p59 = por %p57, %p58
    %p61 = scmp.ne.s32.totalorder %s46, %s60
    %p62 = scmp.eq.s32.totalorder %s15, 0
    %p63 = por %p61, %p62
    %s65 = sadd.s32 %s64, 1
    %p68 = scmp.eq.s32.totalorder %s9, 1
    %p69 = scmp.ne.s32.totalorder %s64, %s66
    %p70 = scmp.eq.s32.totalorder %s9, 0
    %p71 = por %p69, %p70
    %p72 = scmp.ne.s32.totalorder %s64, %s66
    %p73 = scmp.eq.s32.totalorder %s14, 1
    %p74 = por %p72, %p73
    %p75 = scmp.ne.s32.totalorder %s66, %s67
    %p76 = scmp.eq.s32.totalorder %s14, 0
    %p77 = por %p75, %p76
    %p78 = scmp.ne.s32.totalorder %s66, %s67
    %p79 = scmp.eq.s32.totalorder %s15, 1
    %p80 = por %p78, %p79
    %p82 = scmp.ne.s32.totalorder %s67, %s81
    %p83 = scmp.eq.s32.totalorder %s15, 0
    %p84 = por %p82, %p83
    %s85 = ssub.s32 %s9, %s16
    %p86 = scmp.eq.s32.totalorder %s85, 0
    %s88 = sadd.s32 %s87, 1
    %s89 = scalar_select %p86, %s87, %s88
    %p92 = pneg %p86
    %p93 = scmp.eq.s32.totalorder %s9, 1
    %p94 = por %p92, %p93
    %p95 = scmp.ne.s32.totalorder %s87, %s90
    %p96 = scmp.eq.s32.totalorder %s9, 0
    %p97 = por %p95, %p96
    %p98 = scmp.ne.s32.totalorder %s87, %s90
    %p99 = scmp.eq.s32.totalorder %s14, 1
    %p100 = por %p98, %p99
    %p101 = scmp.ne.s32.totalorder %s90, %s91
    %p102 = scmp.eq.s32.totalorder %s14, 0
    %p103 = por %p101, %p102
    %p104 = scmp.ne.s32.totalorder %s90, %s91
    %p105 = scmp.eq.s32.totalorder %s15, 1
    %p106 = por %p104, %p105
    %p108 = scmp.ne.s32.totalorder %s91, %s107
    %p109 = scmp.eq.s32.totalorder %s15, 0
    %p110 = por %p108, %p109
    %p111 = scmp.le.s32.totalorder 1, %s9
    %p112 = scmp.lt.s32.totalorder %s9, 3
    %p113 = pnand %p111, %p112
    %p114 = pneg %p113
    // Predicated region
    $region9: #{tpu_custom_call.1} parent=5 // pred_check
      _
    $region10: #{tpu_custom_call.1} parent=5 // pred_check_branch
      %116 = sbr.rel (%p113) target = $region12
    $region11: #{tpu_custom_call.1} parent=5 // pred_region
      %s117 = ssub.s32 %s9, 1
      // Predicated region
      $region13: #{tpu_custom_call.1} parent=11 // pred_check
        %p118 = pneg %p56
      $region14: #{tpu_custom_call.1} parent=11 // pred_check_branch
        %120 = sbr.rel (%p118) target = $region16
      $region15: #{tpu_custom_call.1} parent=11 // pred_region
        _
      $region16: #{tpu_custom_call.1} parent=11 // pred_fallthru
        _
      // Predicated region
      $region17: #{tpu_custom_call.1} parent=11 // pred_check
        %p121 = pneg %p77
      $region18: #{tpu_custom_call.1} parent=11 // pred_check_branch
        %123 = sbr.rel (%p121) target = $region20
      $region19: #{tpu_custom_call.1} parent=11 // pred_region
        _
      $region20: #{tpu_custom_call.1} parent=11 // pred_fallthru
        _
    $region12: #{tpu_custom_call.1} parent=5 // pred_fallthru
      _
    %p124 = scmp.lt.s32.totalorder %s9, 2
    // Predicated region
    $region21: #{tpu_custom_call.1} parent=5 // pred_check
      %p125 = pneg %p124
    $region22: #{tpu_custom_call.1} parent=5 // pred_check_branch
      %127 = sbr.rel (%p125) target = $region24
    $region23: #{tpu_custom_call.1} parent=5 // pred_region
      // Predicated region
      $region25: #{tpu_custom_call.1} parent=23 // pred_check
        %p128 = pneg %p29
      $region26: #{tpu_custom_call.1} parent=23 // pred_check_branch
        %130 = sbr.rel (%p128) target = $region28
      $region27: #{tpu_custom_call.1} parent=23 // pred_region
        %p131 = scmp.lt.s32.totalorder %s9, 1
        %s132 = scalar_select %p131, %s9, 1
        %s133 = smul.addr %s132, 10
        %s134 = smul.addr %s133, 8
        %s135 = scalar_lea.vmem %s0, %s134
      $region28: #{tpu_custom_call.1} parent=23 // pred_fallthru
        _
    $region24: #{tpu_custom_call.1} parent=5 // pred_fallthru
      _
    %p136 = scmp.le.s32.totalorder 1, %s9
    %p137 = scmp.lt.s32.totalorder %s9, 3
    %p138 = pnand %p136, %p137
    %p139 = pneg %p138
    // Predicated region
    $region29: #{tpu_custom_call.1} parent=5 // pred_check
      _
    $region30: #{tpu_custom_call.1} parent=5 // pred_check_branch
      %141 = sbr.rel (%p138) target = $region32
    $region31: #{tpu_custom_call.1} parent=5 // pred_region
      %s142 = ssub.s32 %s9, 1
      %p143 = scmp.lt.s32.totalorder %s14, 1
      %s144 = scalar_select %p143, %s14, 1
      %s145 = smul.addr %s144, 10
      %s146 = smul.addr %s145, 8
      %s147 = scalar_lea.vmem %s0, %s146
      %p148 = pneg %p35
      %p149 = pneg %p32
      %p150 = pneg %p56
      %p151 = pneg %p53
      %p152 = pneg %p77
      %p153 = pneg %p74
      %p154 = pneg %p103
      %p155 = pneg %p100
      %p156 = scmp.lt.s32.totalorder %s14, 1
      %s157 = scalar_select %p156, %s14, 1
      %s158 = smul.addr %s157, 10
      %s159 = smul.addr %s158, 8
      %s160 = scalar_lea.vmem %s3, %s159
      %p161 = scmp.lt.s32.totalorder %s14, 1
      %s162 = scalar_select %p161, %s14, 1
      %s163 = smul.addr %s162, 10
      %s164 = smul.addr %s163, 8
      %s165 = scalar_lea.vmem %s0, %s164
      %p166 = scmp.lt.s32.totalorder %s14, 1
      %s167 = scalar_select %p166, %s14, 1
      %s168 = smul.addr %s167, 10
      %s169 = smul.addr %s168, 8
      %s170 = scalar_lea.vmem %s3, %s169
      %v171 = vld [vmem:[%s165] sm:$0xff]
      %v172 = vld [vmem:[%s165 + $0x8] sm:$0xff]
      %v173 = vld [vmem:[%s165 + $0x10] sm:$0xff]
      %v174 = vld [vmem:[%s165 + $0x18] sm:$0xff]
      %v175 = vld [vmem:[%s165 + $0x20] sm:$0xff]
      %v176 = vld [vmem:[%s165 + $0x28] sm:$0xff]
      %v177 = vld [vmem:[%s165 + $0x30] sm:$0xff]
      %v178 = vld [vmem:[%s165 + $0x38] sm:$0xff]
      %v179 = vld [vmem:[%s165 + $0x40] sm:$0xf]
      %v180 = vld [vmem:[%s165 + $0x48] sm:$0xf]
      %v181 = vadd.f32 %v171, %v172
      %182 = vadd.xlane.f32.xlu0 %v181
      %v183 = vpop.xlane.xlu0 %182
      %v184 = vadd.f32 %v173, %v174
      %185 = vadd.xlane.f32.xlu0 %v184
      %v186 = vpop.xlane.xlu0 %185
      %v187 = vadd.f32 %v175, %v176
      %188 = vadd.xlane.f32.xlu0 %v187
      %v189 = vpop.xlane.xlu0 %188
      %v190 = vadd.f32 %v177, %v178
      %191 = vadd.xlane.f32.xlu0 %v190
      %v192 = vpop.xlane.xlu0 %191
      %vm193 = vcmask 1043456
      %v194 = vsel %vm193, %v179, 0.0
      %v195 = vsel %vm193, %v180, 0.0
      %v196 = vadd.f32 %v194, %v195
      %197 = vadd.xlane.f32.xlu0 %v196
      %v198 = vpop.xlane.xlu0 %197
      %v199 = vmul.f32 %v183, 0.00390625
      %v200 = vmul.f32 %v186, 0.00390625
      %v201 = vmul.f32 %v189, 0.00390625
      %v202 = vmul.f32 %v192, 0.00390625
      %v203 = vmul.f32 %v198, 0.00390625
      %v204 = vld [vmem:[%s1] sm:$0xff]
      %v205 = vld [vmem:[%s1 + $0x8] sm:$0xff]
      %v206 = vld [vmem:[%s1 + $0x10] sm:$0xff]
      %v207 = vld [vmem:[%s1 + $0x18] sm:$0xff]
      %v208 = vld [vmem:[%s1 + $0x20] sm:$0xf]
      %v209 = vmul.f32 %v204, %v199
      %v210 = vmul.f32 %v205, %v200
      %v211 = vmul.f32 %v206, %v201
      %v212 = vmul.f32 %v207, %v202
      %v213 = vmul.f32 %v208, %v203
      %vm214 = vcmask 15360
      %v215 = vsel %vm214, %v209, 0.0
      %v216 = vsel %vm214, %v210, 0.0
      %v217 = vadd.f32 %v215, %v216
      %v218 = vsel %vm214, %v211, 0.0
      %v219 = vadd.f32 %v217, %v218
      %v220 = vsel %vm214, %v212, 0.0
      %v221 = vadd.f32 %v219, %v220
      %vm222 = vcmask 11264
      %v223 = vsel %vm222, %v213, 0.0
      %v224 = vadd.f32 %v221, %v223
      %v225 = vrot.slane %v224, 4
      %v226 = vadd.f32 %v224, %v225
      %v227 = vrot.slane %v226, 2
      %v228 = vadd.f32 %v226, %v227
      %v229 = vrot.slane %v228, 1
      %v230 = vadd.f32 %v228, %v229
      %v231 = vmax.f32 %v230, 0.0
      %v232 = vld [vmem:[%s2] sm:$0xff]
      %v233 = vld [vmem:[%s2 + $0x8] sm:$0xff]
      %v234 = vld [vmem:[%s2 + $0x10] sm:$0xff]
      %v235 = vld [vmem:[%s2 + $0x18] sm:$0xff]
      %v236 = vld [vmem:[%s2 + $0x20] sm:$0xf]
      %v237 = vmul.f32 %v232, %v231
      %v238 = vmul.f32 %v233, %v231
      %v239 = vmul.f32 %v234, %v231
      %v240 = vmul.f32 %v235, %v231
      %v241 = vmul.f32 %v236, %v231
      %v242 = vsel %vm214, %v237, 0.0
      %243 = vadd.xlane.f32.xlu0 %v242
      %v244 = vpop.xlane.xlu0 %243
      %v245 = vsel %vm214, %v238, 0.0
      %246 = vadd.xlane.f32.xlu0 %v245
      %v247 = vpop.xlane.xlu0 %246
      %v248 = vsel %vm214, %v239, 0.0
      %249 = vadd.xlane.f32.xlu0 %v248
      %v250 = vpop.xlane.xlu0 %249
      %v251 = vsel %vm214, %v240, 0.0
      %252 = vadd.xlane.f32.xlu0 %v251
      %v253 = vpop.xlane.xlu0 %252
      %v254 = vsel %vm222, %v241, 0.0
      %255 = vadd.xlane.f32.xlu0 %v254
      %v256 = vpop.xlane.xlu0 %255
      %v257 = vxor.u32 %v244, 2147483648
      %v258 = vxor.u32 %v247, 2147483648
      %v259 = vxor.u32 %v250, 2147483648
      %v260 = vxor.u32 %v253, 2147483648
      %v261 = vxor.u32 %v256, 2147483648
      %v262 = vmul.f32 %v257, 1.442695
      %v263 = vpow.pop %v262
      %v264 = vmul.f32 %v258, 1.442695
      %v265 = vpow.pop %v264
      %v266 = vmul.f32 %v259, 1.442695
      %v267 = vpow.pop %v266
      %v268 = vmul.f32 %v260, 1.442695
      %v269 = vpow.pop %v268
      %v270 = vmul.f32 %v261, 1.442695
      %v271 = vpow.pop %v270
      %v272 = vadd.f32 %v263, 1.0
      %v273 = vadd.f32 %v265, 1.0
      %v274 = vadd.f32 %v267, 1.0
      %v275 = vadd.f32 %v269, 1.0
      %v276 = vadd.f32 %v271, 1.0
      %v277 = vrcp.pop %v272
      %v278 = vmul.f32 1.0, %v277
      %v279 = vrcp.pop %v273
      %v280 = vmul.f32 1.0, %v279
      %v281 = vrcp.pop %v274
      %v282 = vmul.f32 1.0, %v281
      %v283 = vrcp.pop %v275
      %v284 = vmul.f32 1.0, %v283
      %v285 = vrcp.pop %v276
      %v286 = vmul.f32 1.0, %v285
      %v287 = vmul.f32 %v171, %v278
      %v288 = vmul.f32 %v172, %v278
      %v289 = vmul.f32 %v173, %v280
      %v290 = vmul.f32 %v174, %v280
      %v291 = vmul.f32 %v175, %v282
      %v292 = vmul.f32 %v176, %v282
      %v293 = vmul.f32 %v177, %v284
      %v294 = vmul.f32 %v178, %v284
      %v295 = vmul.f32 %v179, %v286
      %v296 = vmul.f32 %v180, %v286
      %297 = vst [vmem:[%s170] sm:$0xff] %v287
      %298 = vst [vmem:[%s170 + $0x8] sm:$0xff] %v288
      %299 = vst [vmem:[%s170 + $0x10] sm:$0xff] %v289
      %300 = vst [vmem:[%s170 + $0x18] sm:$0xff] %v290
      %301 = vst [vmem:[%s170 + $0x20] sm:$0xff] %v291
      %302 = vst [vmem:[%s170 + $0x28] sm:$0xff] %v292
      %303 = vst [vmem:[%s170 + $0x30] sm:$0xff] %v293
      %304 = vst [vmem:[%s170 + $0x38] sm:$0xff] %v294
      %305 = vst [vmem:[%s170 + $0x40] sm:$0xf] %v295
      %306 = vst [vmem:[%s170 + $0x48] sm:$0xf] %v296
      %p307 = scmp.lt.s32.totalorder %s14, 1
      %s308 = scalar_select %p307, %s14, 1
      %s309 = smul.addr %s308, 10
      %s310 = smul.addr %s309, 8
      %s311 = scalar_lea.vmem %s3, %s310
      // Predicated region
      $region33: #{tpu_custom_call.1} parent=31 // pred_check
        %p312 = pneg %p100
      $region34: #{tpu_custom_call.1} parent=31 // pred_check_branch
        %314 = sbr.rel (%p312) target = $region36
      $region35: #{tpu_custom_call.1} parent=31 // pred_region
        _
      $region36: #{tpu_custom_call.1} parent=31 // pred_fallthru
        _
    $region32: #{tpu_custom_call.1} parent=5 // pred_fallthru
      _
    %p315 = scmp.le.s32.totalorder 2, %s9
    // Predicated region
    $region37: #{tpu_custom_call.1} parent=5 // pred_check
      %p316 = pneg %p315
    $region38: #{tpu_custom_call.1} parent=5 // pred_check_branch
      %318 = sbr.rel (%p316) target = $region40
    $region39: #{tpu_custom_call.1} parent=5 // pred_region
      %s319 = ssub.s32 %s9, 2
      // Predicated region
      $region41: #{tpu_custom_call.1} parent=39 // pred_check
        %p320 = pneg %p106
      $region42: #{tpu_custom_call.1} parent=39 // pred_check_branch
        %322 = sbr.rel (%p320) target = $region44
      $region43: #{tpu_custom_call.1} parent=39 // pred_region
        %p323 = scmp.lt.s32.totalorder %s15, 1
        %s324 = scalar_select %p323, %s15, 1
        %s325 = smul.addr %s324, 10
        %s326 = smul.addr %s325, 8
        %s327 = scalar_lea.vmem %s3, %s326
      $region44: #{tpu_custom_call.1} parent=39 // pred_fallthru
        _
    $region40: #{tpu_custom_call.1} parent=5 // pred_fallthru
      _
  $region6: #{tpu_custom_call.1} parent=0 // loop_footer
    %s13 = sadd.s32 1, %s9
  $region7: #{tpu_custom_call.1} parent=0 // loop_footer_branch
    %8 = sbr.rel target = $region3
  $region8: #{tpu_custom_call.1} parent=0 // loop_exit
    _

</llo_original>
